<compile_context>
chip_gen: v6e
topology: v6e:2x2x1
jax: 0.10.0
libtpu: 0.0.40
codegen_flags: <defaults>
</compile_context>

<pallas_src>
import functools

import jax
import jax.numpy as jnp
from jax.experimental import pallas as pl
from jax.experimental.pallas import tpu as pltpu


def _round_up(x, m):
    return (x + m - 1) // m * m


def ffn_kernel(x_ref, w1_ref, b1_ref, w2_ref, b2_ref, o_ref, *, d_model):
    # x_ref: (tm, d_pad)   w1: (d_pad, ff_pad)   b1: (1, ff_pad)
    # w2: (ff_pad, d_pad)  b2: (1, d_pad)        o:  (tm, d_pad)
    x = x_ref[...]                      # native dtype -> MXU at full rate
    xf = x.astype(jnp.float32)          # f32 copy for the residual / LN path

    # fc[0]: Linear(d_model -> feed_forward_dim), f32 accumulation.
    h = jnp.dot(x, w1_ref[...], preferred_element_type=jnp.float32)
    h = h + b1_ref[...].astype(jnp.float32)
    # fc[1]: Dropout -> identity (eval semantics).
    # fc[2]: ReLU
    h = jnp.maximum(h, 0.0)
    # fc[3]: Linear(feed_forward_dim -> d_model), f32 accumulation.
    y = jnp.dot(h.astype(w2_ref.dtype), w2_ref[...],
                preferred_element_type=jnp.float32)
    # bias + residual epilogue (once per tile; nothing re-broadcast in a loop)
    y = y + b2_ref[...].astype(jnp.float32) + xf

    # LayerNorm(d_model), gamma=1, beta=0, eps=1e-5.  Statistics are over the
    # TRUE d_model lanes; padded lanes of y are exactly zero pre-LN.
    d_pad = y.shape[-1]
    inv_d = 1.0 / d_model
    if d_pad != d_model:
        lane = jax.lax.broadcasted_iota(jnp.int32, y.shape, 1)
        valid = lane < d_model
        y = jnp.where(valid, y, 0.0)
    mean = jnp.sum(y, axis=-1, keepdims=True) * inv_d
    centered = y - mean
    if d_pad != d_model:
        centered = jnp.where(valid, centered, 0.0)
    var = jnp.sum(centered * centered, axis=-1, keepdims=True) * inv_d
    o_ref[...] = (centered * jax.lax.rsqrt(var + 1e-5)).astype(o_ref.dtype)


@functools.partial(jax.jit, static_argnames=("tm", "single_buffer_weights"))
def _feed_forward_impl(x, w1, b1, w2, b2, *, tm, single_buffer_weights):
    B, S, d_model = x.shape
    ff = w1.shape[1]
    M = B * S

    # Lane-align the feature dims to 128 for dense vst/vld (zero padding keeps
    # the math exact; see kernel LN masking).
    d_pad = _round_up(d_model, 128)
    ff_pad = _round_up(ff, 128)

    x2d = jnp.pad(x.reshape(M, d_model), ((0, 0), (0, d_pad - d_model)))
    w1p = jnp.pad(w1, ((0, d_pad - d_model), (0, ff_pad - ff)))
    b1p = jnp.pad(b1, (0, ff_pad - ff)).reshape(1, ff_pad)
    w2p = jnp.pad(w2, ((0, ff_pad - ff), (0, d_pad - d_model)))
    b2p = jnp.pad(b2, (0, d_pad - d_model)).reshape(1, d_pad)

    # Large M tile (multiple of 8), clamped for small problems.
    tm_eff = min(tm, _round_up(M, 8))
    grid = (pl.cdiv(M, tm_eff),)

    # Scoped-VMEM budget: weights/biases (+buffering), double-buffered x/out
    # tiles, and the (tm, ff) f32 intermediate.  Raise the limit above the
    # 16/32 MiB defaults, with headroom, clamped to physical VMEM.
    wb_bufs = 1 if single_buffer_weights else 2
    w_bytes = (d_pad * ff_pad + ff_pad * d_pad) * w1.dtype.itemsize
    b_bytes = (ff_pad + d_pad) * b1.dtype.itemsize
    io_bytes = 2 * 2 * tm_eff * d_pad * x.dtype.itemsize
    h_bytes = tm_eff * ff_pad * 4
    est = wb_bufs * (w_bytes + b_bytes) + io_bytes + h_bytes
    vmem_limit = max(32 << 20, min(int(1.5 * est) + (4 << 20), 128 << 20))

    def const_spec(shape):
        # Weights/biases: block index never changes across the grid.
        if single_buffer_weights:
            return pl.BlockSpec(shape, lambda i: (0, 0),
                                pipeline_mode=pl.Buffered(1))
        return pl.BlockSpec(shape, lambda i: (0, 0))

    out = pl.pallas_call(
        functools.partial(ffn_kernel, d_model=d_model),
        out_shape=jax.ShapeDtypeStruct((M, d_pad), x.dtype),
        grid_spec=pltpu.PrefetchScalarGridSpec(
            num_scalar_prefetch=0,
            grid=grid,
            in_specs=[
                pl.BlockSpec((tm_eff, d_pad), lambda i: (i, 0)),
                const_spec((d_pad, ff_pad)),
                const_spec((1, ff_pad)),
                const_spec((ff_pad, d_pad)),
                const_spec((1, d_pad)),
            ],
            out_specs=pl.BlockSpec((tm_eff, d_pad), lambda i: (i, 0)),
        ),
        compiler_params=pltpu.CompilerParams(
            dimension_semantics=("parallel",),   # shards M across TCs on v7x
            vmem_limit_bytes=vmem_limit,
        ),
    )(x2d, w1p, b1p, w2p, b2p)

    if d_pad != d_model:
        out = out[:, :d_model]
    return out.reshape(B, S, d_model)


def feed_forward(x, w1, b1, w2, b2, *, tm=256):
    """Fused FFN + residual + LayerNorm.  tm: M-tile rows (sweep 128-512)."""
    try:
        return _feed_forward_impl(x, w1, b1, w2, b2, tm=tm,
                                  single_buffer_weights=True)
    except Exception:
        # Fallback for JAX builds where BlockSpec.pipeline_mode / pl.Buffered
        # is unsupported on pallas_call: identical math, default buffering.
        return _feed_forward_impl(x, w1, b1, w2, b2, tm=tm,
                                  single_buffer_weights=False)


def init_params(key, d_model, feed_forward_dim):
    """Deterministic init mimicking nn.Linear defaults."""
    k1, k2, k3, k4 = jax.random.split(key, 4)
    lim1 = 1.0 / jnp.sqrt(d_model)
    lim2 = 1.0 / jnp.sqrt(feed_forward_dim)
    w1 = jax.random.uniform(k1, (d_model, feed_forward_dim),
                            jnp.float32, -lim1, lim1)
    b1 = jax.random.uniform(k2, (feed_forward_dim,), jnp.float32, -lim1, lim1)
    w2 = jax.random.uniform(k3, (feed_forward_dim, d_model),
                            jnp.float32, -lim2, lim2)
    b2 = jax.random.uniform(k4, (d_model,), jnp.float32, -lim2, lim2)
    return w1, b1, w2, b2


if __name__ == "__main__":
    B, S, d_model, ff_dim = 2, 8, 32, 64
    key = jax.random.PRNGKey(0)
    kx, kp = jax.random.split(key)
    x = jax.random.normal(kx, (B, S, d_model), jnp.float32)
    w1, b1, w2, b2 = init_params(kp, d_model, ff_dim)

    out = feed_forward(x, w1, b1, w2, b2)
    out = jax.block_until_ready(out)

    # Pure-JAX reference (eval-mode dropout == identity).
    h_ref = jnp.maximum(x @ w1 + b1, 0.0)
    y_ref = h_ref @ w2 + b2 + x
    mu = y_ref.mean(-1, keepdims=True)
    var = ((y_ref - mu) ** 2).mean(-1, keepdims=True)
    ref = (y_ref - mu) / jnp.sqrt(var + 1e-5)

    assert out.shape == (B, S, d_model)
    assert jnp.allclose(out, ref, atol=1e-4, rtol=1e-4), \
        float(jnp.max(jnp.abs(out - ref)))

    print("KERNEL_OK")
</pallas_src>

<mosaic_0001>
module attributes {stable_mosaic.version = 11 : i64} {
  func.func @ffn_kernel(%arg0: i32, %arg1: memref<16x128xf32, #tpu.memory_space<vmem>>, %arg2: memref<128x128xf32, #tpu.memory_space<vmem>>, %arg3: memref<1x128xf32, #tpu.memory_space<vmem>>, %arg4: memref<128x128xf32, #tpu.memory_space<vmem>>, %arg5: memref<1x128xf32, #tpu.memory_space<vmem>>, %arg6: memref<16x128xf32, #tpu.memory_space<vmem>>) attributes {dimension_semantics = [#tpu.dimension_semantics<parallel>], iteration_bounds = array<i64: 1>, scalar_prefetch = 0 : i64, scratch_operands = 0 : i64, tpu.core_type = #tpu.core_type<tc>, window_params = [{transform_indices = @transform_0, window_bounds = array<i64: 16, 128>}, {pipeline_mode = #tpu.pipeline_mode<synchronous>, transform_indices = @transform_1, window_bounds = array<i64: 128, 128>}, {pipeline_mode = #tpu.pipeline_mode<synchronous>, transform_indices = @transform_2, window_bounds = array<i64: 1, 128>}, {pipeline_mode = #tpu.pipeline_mode<synchronous>, transform_indices = @transform_3, window_bounds = array<i64: 128, 128>}, {pipeline_mode = #tpu.pipeline_mode<synchronous>, transform_indices = @transform_4, window_bounds = array<i64: 1, 128>}, {transform_indices = @transform_5, window_bounds = array<i64: 16, 128>}]} {
    %c0 = arith.constant 0 : index
    %c0_0 = arith.constant 0 : index
    %0 = vector.load %arg1[%c0, %c0_0] : memref<16x128xf32, #tpu.memory_space<vmem>>, vector<16x128xf32>
    %c0_1 = arith.constant 0 : index
    %c0_2 = arith.constant 0 : index
    %1 = vector.load %arg2[%c0_1, %c0_2] : memref<128x128xf32, #tpu.memory_space<vmem>>, vector<128x128xf32>
    %cst = arith.constant dense<0.000000e+00> : vector<16x128xf32>
    %2 = tpu.matmul %0, %1, %cst {dimension_numbers = #tpu.dot_dimension_numbers<[1], [0], [0], [1], [0, 0, 1, 1], [], []>} : vector<16x128xf32>, vector<128x128xf32>, vector<16x128xf32> -> vector<16x128xf32>
    %c0_3 = arith.constant 0 : index
    %c0_4 = arith.constant 0 : index
    %3 = vector.load %arg3[%c0_3, %c0_4] : memref<1x128xf32, #tpu.memory_space<vmem>>, vector<1x128xf32>
    %4 = vector.broadcast %3 : vector<1x128xf32> to vector<16x128xf32>
    %5 = arith.addf %2, %4 : vector<16x128xf32>
    %cst_5 = arith.constant 0.000000e+00 : f32
    %6 = vector.broadcast %cst_5 : f32 to vector<16x128xf32>
    %7 = arith.maximumf %5, %6 : vector<16x128xf32>
    %c0_6 = arith.constant 0 : index
    %c0_7 = arith.constant 0 : index
    %8 = vector.load %arg4[%c0_6, %c0_7] : memref<128x128xf32, #tpu.memory_space<vmem>>, vector<128x128xf32>
    %cst_8 = arith.constant dense<0.000000e+00> : vector<16x128xf32>
    %9 = tpu.matmul %7, %8, %cst_8 {dimension_numbers = #tpu.dot_dimension_numbers<[1], [0], [0], [1], [0, 0, 1, 1], [], []>} : vector<16x128xf32>, vector<128x128xf32>, vector<16x128xf32> -> vector<16x128xf32>
    %c0_9 = arith.constant 0 : index
    %c0_10 = arith.constant 0 : index
    %10 = vector.load %arg5[%c0_9, %c0_10] : memref<1x128xf32, #tpu.memory_space<vmem>>, vector<1x128xf32>
    %11 = vector.broadcast %10 : vector<1x128xf32> to vector<16x128xf32>
    %12 = arith.addf %9, %11 : vector<16x128xf32>
    %13 = arith.addf %12, %0 : vector<16x128xf32>
    %14 = tpu.iota {dimensions = array<i32: 1>} : vector<16x128xi32>
    %c32_i32 = arith.constant 32 : i32
    %15 = vector.broadcast %c32_i32 : i32 to vector<16x128xi32>
    %16 = arith.cmpi slt, %14, %15 : vector<16x128xi32>
    %cst_11 = arith.constant 0.000000e+00 : f32
    %17 = vector.broadcast %cst_11 : f32 to vector<16x128xf32>
    %18 = arith.select %16, %13, %17 : vector<16x128xi1>, vector<16x128xf32>
    %cst_12 = arith.constant dense<0.000000e+00> : vector<16xf32>
    %19 = vector.multi_reduction <add>, %18, %cst_12 [1] : vector<16x128xf32> to vector<16xf32>
    %20 = vector.shape_cast %19 : vector<16xf32> to vector<16x1xf32>
    %cst_13 = arith.constant 3.125000e-02 : f32
    %21 = vector.broadcast %cst_13 : f32 to vector<16x1xf32>
    %22 = arith.mulf %20, %21 : vector<16x1xf32>
    %23 = vector.broadcast %22 : vector<16x1xf32> to vector<16x128xf32>
    %24 = arith.subf %18, %23 : vector<16x128xf32>
    %cst_14 = arith.constant 0.000000e+00 : f32
    %25 = vector.broadcast %cst_14 : f32 to vector<16x128xf32>
    %26 = arith.select %16, %24, %25 : vector<16x128xi1>, vector<16x128xf32>
    %27 = arith.mulf %26, %26 : vector<16x128xf32>
    %cst_15 = arith.constant dense<0.000000e+00> : vector<16xf32>
    %28 = vector.multi_reduction <add>, %27, %cst_15 [1] : vector<16x128xf32> to vector<16xf32>
    %29 = vector.shape_cast %28 : vector<16xf32> to vector<16x1xf32>
    %cst_16 = arith.constant 3.125000e-02 : f32
    %30 = vector.broadcast %cst_16 : f32 to vector<16x1xf32>
    %31 = arith.mulf %29, %30 : vector<16x1xf32>
    %cst_17 = arith.constant 9.99999974E-6 : f32
    %32 = vector.broadcast %cst_17 : f32 to vector<16x1xf32>
    %33 = arith.addf %31, %32 : vector<16x1xf32>
    %34 = math.rsqrt %33 : vector<16x1xf32>
    %35 = vector.broadcast %34 : vector<16x1xf32> to vector<16x128xf32>
    %36 = arith.mulf %26, %35 : vector<16x128xf32>
    %c0_18 = arith.constant 0 : index
    %c0_19 = arith.constant 0 : index
    %37 = vector.load %arg6[%c0_18, %c0_19] : memref<16x128xf32, #tpu.memory_space<vmem>>, vector<16x128xf32>
    tpu.vector_store %arg6[%c0_18, %c0_19], %36 {strides = array<i32>} : memref<16x128xf32, #tpu.memory_space<vmem>>, vector<16x128xf32>,
    return
  }
  func.func @transform_0(%arg0: i32) -> (i32, i32) {
    %c0_i32 = arith.constant 0 : i32
    %c0_i32_0 = arith.constant 0 : i32
    return %arg0, %c0_i32 : i32, i32
  }
  func.func @transform_1(%arg0: i32) -> (i32, i32) {
    %c0_i32 = arith.constant 0 : i32
    %c0_i32_0 = arith.constant 0 : i32
    %c0_i32_1 = arith.constant 0 : i32
    return %c0_i32, %c0_i32_0 : i32, i32
  }
  func.func @transform_2(%arg0: i32) -> (i32, i32) {
    %c0_i32 = arith.constant 0 : i32
    %c0_i32_0 = arith.constant 0 : i32
    %c0_i32_1 = arith.constant 0 : i32
    return %c0_i32, %c0_i32_0 : i32, i32
  }
  func.func @transform_3(%arg0: i32) -> (i32, i32) {
    %c0_i32 = arith.constant 0 : i32
    %c0_i32_0 = arith.constant 0 : i32
    %c0_i32_1 = arith.constant 0 : i32
    return %c0_i32, %c0_i32_0 : i32, i32
  }
  func.func @transform_4(%arg0: i32) -> (i32, i32) {
    %c0_i32 = arith.constant 0 : i32
    %c0_i32_0 = arith.constant 0 : i32
    %c0_i32_1 = arith.constant 0 : i32
    return %c0_i32, %c0_i32_0 : i32, i32
  }
  func.func @transform_5(%arg0: i32) -> (i32, i32) {
    %c0_i32 = arith.constant 0 : i32
    %c0_i32_0 = arith.constant 0 : i32
    return %arg0, %c0_i32 : i32, i32
  }
}

module attributes {stable_mosaic.version = 11 : i64} {
  func.func @ffn_kernel(%arg0: i32, %arg1: memref<16x128xf32, #tpu.memory_space<vmem>>, %arg2: memref<128x128xf32, #tpu.memory_space<vmem>>, %arg3: memref<1x128xf32, #tpu.memory_space<vmem>>, %arg4: memref<128x128xf32, #tpu.memory_space<vmem>>, %arg5: memref<1x128xf32, #tpu.memory_space<vmem>>, %arg6: memref<16x128xf32, #tpu.memory_space<vmem>>) attributes {dimension_semantics = [#tpu.dimension_semantics<parallel>], iteration_bounds = array<i64: 1>, scalar_prefetch = 0 : i64, scratch_operands = 0 : i64, tpu.core_type = #tpu.core_type<tc>, window_params = [{transform_indices = @transform_0, window_bounds = array<i64: 16, 128>}, {pipeline_mode = #tpu.pipeline_mode<synchronous>, transform_indices = @transform_1, window_bounds = array<i64: 128, 128>}, {pipeline_mode = #tpu.pipeline_mode<synchronous>, transform_indices = @transform_2, window_bounds = array<i64: 1, 128>}, {pipeline_mode = #tpu.pipeline_mode<synchronous>, transform_indices = @transform_3, window_bounds = array<i64: 128, 128>}, {pipeline_mode = #tpu.pipeline_mode<synchronous>, transform_indices = @transform_4, window_bounds = array<i64: 1, 128>}, {transform_indices = @transform_5, window_bounds = array<i64: 16, 128>}]} {
    %c0 = arith.constant 0 : index
    %c0_0 = arith.constant 0 : index
    %0 = vector.load %arg1[%c0, %c0_0] : memref<16x128xf32, #tpu.memory_space<vmem>>, vector<16x128xf32>
    %c0_1 = arith.constant 0 : index
    %c0_2 = arith.constant 0 : index
    %1 = vector.load %arg2[%c0_1, %c0_2] : memref<128x128xf32, #tpu.memory_space<vmem>>, vector<128x128xf32>
    %cst = arith.constant dense<0.000000e+00> : vector<16x128xf32>
    %2 = tpu.matmul %0, %1, %cst {dimension_numbers = #tpu.dot_dimension_numbers<[1], [0], [0], [1], [0, 0, 1, 1], [], []>} : vector<16x128xf32>, vector<128x128xf32>, vector<16x128xf32> -> vector<16x128xf32>
    %c0_3 = arith.constant 0 : index
    %c0_4 = arith.constant 0 : index
    %3 = vector.load %arg3[%c0_3, %c0_4] : memref<1x128xf32, #tpu.memory_space<vmem>>, vector<1x128xf32>
    %4 = vector.broadcast %3 : vector<1x128xf32> to vector<16x128xf32>
    %5 = arith.addf %2, %4 : vector<16x128xf32>
    %cst_5 = arith.constant 0.000000e+00 : f32
    %6 = vector.broadcast %cst_5 : f32 to vector<16x128xf32>
    %7 = arith.maximumf %5, %6 : vector<16x128xf32>
    %c0_6 = arith.constant 0 : index
    %c0_7 = arith.constant 0 : index
    %8 = vector.load %arg4[%c0_6, %c0_7] : memref<128x128xf32, #tpu.memory_space<vmem>>, vector<128x128xf32>
    %cst_8 = arith.constant dense<0.000000e+00> : vector<16x128xf32>
    %9 = tpu.matmul %7, %8, %cst_8 {dimension_numbers = #tpu.dot_dimension_numbers<[1], [0], [0], [1], [0, 0, 1, 1], [], []>} : vector<16x128xf32>, vector<128x128xf32>, vector<16x128xf32> -> vector<16x128xf32>
    %c0_9 = arith.constant 0 : index
    %c0_10 = arith.constant 0 : index
    %10 = vector.load %arg5[%c0_9, %c0_10] : memref<1x128xf32, #tpu.memory_space<vmem>>, vector<1x128xf32>
    %11 = vector.broadcast %10 : vector<1x128xf32> to vector<16x128xf32>
    %12 = arith.addf %9, %11 : vector<16x128xf32>
    %13 = arith.addf %12, %0 : vector<16x128xf32>
    %14 = tpu.iota {dimensions = array<i32: 1>} : vector<16x128xi32>
    %c32_i32 = arith.constant 32 : i32
    %15 = vector.broadcast %c32_i32 : i32 to vector<16x128xi32>
    %16 = arith.cmpi slt, %14, %15 : vector<16x128xi32>
    %cst_11 = arith.constant 0.000000e+00 : f32
    %17 = vector.broadcast %cst_11 : f32 to vector<16x128xf32>
    %18 = arith.select %16, %13, %17 : vector<16x128xi1>, vector<16x128xf32>
    %cst_12 = arith.constant dense<0.000000e+00> : vector<16xf32>
    %19 = vector.multi_reduction <add>, %18, %cst_12 [1] : vector<16x128xf32> to vector<16xf32>
    %20 = vector.shape_cast %19 : vector<16xf32> to vector<16x1xf32>
    %cst_13 = arith.constant 3.125000e-02 : f32
    %21 = vector.broadcast %cst_13 : f32 to vector<16x1xf32>
    %22 = arith.mulf %20, %21 : vector<16x1xf32>
    %23 = vector.broadcast %22 : vector<16x1xf32> to vector<16x128xf32>
    %24 = arith.subf %18, %23 : vector<16x128xf32>
    %cst_14 = arith.constant 0.000000e+00 : f32
    %25 = vector.broadcast %cst_14 : f32 to vector<16x128xf32>
    %26 = arith.select %16, %24, %25 : vector<16x128xi1>, vector<16x128xf32>
    %27 = arith.mulf %26, %26 : vector<16x128xf32>
    %cst_15 = arith.constant dense<0.000000e+00> : vector<16xf32>
    %28 = vector.multi_reduction <add>, %27, %cst_15 [1] : vector<16x128xf32> to vector<16xf32>
    %29 = vector.shape_cast %28 : vector<16xf32> to vector<16x1xf32>
    %cst_16 = arith.constant 3.125000e-02 : f32
    %30 = vector.broadcast %cst_16 : f32 to vector<16x1xf32>
    %31 = arith.mulf %29, %30 : vector<16x1xf32>
    %cst_17 = arith.constant 9.99999974E-6 : f32
    %32 = vector.broadcast %cst_17 : f32 to vector<16x1xf32>
    %33 = arith.addf %31, %32 : vector<16x1xf32>
    %34 = math.rsqrt %33 : vector<16x1xf32>
    %35 = vector.broadcast %34 : vector<16x1xf32> to vector<16x128xf32>
    %36 = arith.mulf %26, %35 : vector<16x128xf32>
    %c0_18 = arith.constant 0 : index
    %c0_19 = arith.constant 0 : index
    %37 = vector.load %arg6[%c0_18, %c0_19] : memref<16x128xf32, #tpu.memory_space<vmem>>, vector<16x128xf32>
    tpu.vector_store %arg6[%c0_18, %c0_19], %36 {strides = array<i32>} : memref<16x128xf32, #tpu.memory_space<vmem>>, vector<16x128xf32>,
    return
  }
  func.func @transform_0(%arg0: i32) -> (i32, i32) {
    %c0_i32 = arith.constant 0 : i32
    %c0_i32_0 = arith.constant 0 : i32
    return %arg0, %c0_i32 : i32, i32
  }
  func.func @transform_1(%arg0: i32) -> (i32, i32) {
    %c0_i32 = arith.constant 0 : i32
    %c0_i32_0 = arith.constant 0 : i32
    %c0_i32_1 = arith.constant 0 : i32
    return %c0_i32, %c0_i32_0 : i32, i32
  }
  func.func @transform_2(%arg0: i32) -> (i32, i32) {
    %c0_i32 = arith.constant 0 : i32
    %c0_i32_0 = arith.constant 0 : i32
    %c0_i32_1 = arith.constant 0 : i32
    return %c0_i32, %c0_i32_0 : i32, i32
  }
  func.func @transform_3(%arg0: i32) -> (i32, i32) {
    %c0_i32 = arith.constant 0 : i32
    %c0_i32_0 = arith.constant 0 : i32
    %c0_i32_1 = arith.constant 0 : i32
    return %c0_i32, %c0_i32_0 : i32, i32
  }
  func.func @transform_4(%arg0: i32) -> (i32, i32) {
    %c0_i32 = arith.constant 0 : i32
    %c0_i32_0 = arith.constant 0 : i32
    %c0_i32_1 = arith.constant 0 : i32
    return %c0_i32, %c0_i32_0 : i32, i32
  }
  func.func @transform_5(%arg0: i32) -> (i32, i32) {
    %c0_i32 = arith.constant 0 : i32
    %c0_i32_0 = arith.constant 0 : i32
    return %arg0, %c0_i32 : i32, i32
  }
}

</mosaic_0001>

<llo_original>
// kernel: _feed_forward_impl.1
$region0: #{_feed_forward_impl.1}
  #allocation0 [shape = 'u32[]', space=smem, size = 0x4, offset = 0x4, fixed_abs, tag = 'smem constant byte address 0x4 - core index']
  #allocation1 [shape = 'u32[144,128]{1,0:T(1,128)}', space=vmem, size = 0x12000, scoped, tag = 'internal scratch']
  %s0 = inlined_call_operand.vmem [shape: f32[16,128], index: 0, kind: input, shape index: {}]
  %s1 = inlined_call_operand.vmem [shape: f32[128,128], index: 1, kind: input, shape index: {}]
  %s2 = inlined_call_operand.vmem [shape: f32[1,128], index: 2, kind: input, shape index: {}]
  %s3 = inlined_call_operand.vmem [shape: f32[128,128], index: 3, kind: input, shape index: {}]
  %s4 = inlined_call_operand.vmem [shape: f32[1,128], index: 4, kind: input, shape index: {}]
  %s5 = inlined_call_operand.vmem [shape: f32[16,128], index: 5, kind: output, shape index: {}]
  %s6 = sld [smem:[#allocation0]]
  $region30: #{_feed_forward_impl.1} parent=0
    _
  %s8 = ssub.s32 1, %s6
  %s9 = scalar_select 0, %s8, %s6
  // Predicated region
  $region2: #{_feed_forward_impl.1} parent=0 // pred_check
    _
  $region3: #{_feed_forward_impl.1} parent=0 // pred_check_branch
    %11 = sbr.rel (0) target = $region5
  $region4: #{_feed_forward_impl.1} parent=0 // pred_region
    _
  $region5: #{_feed_forward_impl.1} parent=0 // pred_fallthru
    _
  // Predicated region
  $region6: #{_feed_forward_impl.1} parent=0 // pred_check
    _
  $region7: #{_feed_forward_impl.1} parent=0 // pred_check_branch
    %13 = sbr.rel (0) target = $region9
  $region8: #{_feed_forward_impl.1} parent=0 // pred_region
    _
  $region9: #{_feed_forward_impl.1} parent=0 // pred_fallthru
    _
  // Predicated region
  $region10: #{_feed_forward_impl.1} parent=0 // pred_check
    _
  $region11: #{_feed_forward_impl.1} parent=0 // pred_check_branch
    %15 = sbr.rel (0) target = $region13
  $region12: #{_feed_forward_impl.1} parent=0 // pred_region
    _
  $region13: #{_feed_forward_impl.1} parent=0 // pred_fallthru
    _
  // Predicated region
  $region14: #{_feed_forward_impl.1} parent=0 // pred_check
    _
  $region15: #{_feed_forward_impl.1} parent=0 // pred_check_branch
    %17 = sbr.rel (0) target = $region17
  $region16: #{_feed_forward_impl.1} parent=0 // pred_region
    _
  $region17: #{_feed_forward_impl.1} parent=0 // pred_fallthru
    _
  // Predicated region
  $region18: #{_feed_forward_impl.1} parent=0 // pred_check
    _
  $region19: #{_feed_forward_impl.1} parent=0 // pred_check_branch
    %19 = sbr.rel (0) target = $region21
  $region20: #{_feed_forward_impl.1} parent=0 // pred_region
    _
  $region21: #{_feed_forward_impl.1} parent=0 // pred_fallthru
    _
  %v20 = vld [vmem:[%s0] sm:$0xff]
  %v21 = vld [vmem:[%s0 + $0x8] sm:$0xff]
  %v22 = vld [vmem:[%s1] sm:$0xff]
  %v23 = vld [vmem:[%s1 + $0x8] sm:$0xff]
  %v24 = vld [vmem:[%s1 + $0x10] sm:$0xff]
  %v25 = vld [vmem:[%s1 + $0x18] sm:$0xff]
  %v26 = vld [vmem:[%s1 + $0x20] sm:$0xff]
  %v27 = vld [vmem:[%s1 + $0x28] sm:$0xff]
  %v28 = vld [vmem:[%s1 + $0x30] sm:$0xff]
  %v29 = vld [vmem:[%s1 + $0x38] sm:$0xff]
  %v30 = vld [vmem:[%s1 + $0x40] sm:$0xff]
  %v31 = vld [vmem:[%s1 + $0x48] sm:$0xff]
  %v32 = vld [vmem:[%s1 + $0x50] sm:$0xff]
  %v33 = vld [vmem:[%s1 + $0x58] sm:$0xff]
  %v34 = vld [vmem:[%s1 + $0x60] sm:$0xff]
  %v35 = vld [vmem:[%s1 + $0x68] sm:$0xff]
  %v36 = vld [vmem:[%s1 + $0x70] sm:$0xff]
  %v37 = vld [vmem:[%s1 + $0x78] sm:$0xff]
  %v38 = vld [vmem:[%s2] sm:$0x1]
  %v40 = vlaneseq
  %v41 = vshrl.u32 %v40, 7
  %v42 = vsub.s32 0, %v41
  %v43 = vrot.slane %v38, %v42
  %45 = vmatprep.subr.mxu0 0.0
  %46 = vmatpush1.msra.mxu0 %v37
  %47 = vmatprep.subr.mxu0 0.0
  %48 = vmatpush1.msra.mxu0 %v36
  %49 = vmatprep.subr.mxu0 0.0
  %50 = vmatpush1.msra.mxu0 %v35
  %51 = vmatprep.subr.mxu0 0.0
  %52 = vmatpush1.msra.mxu0 %v34
  %53 = vmatprep.subr.mxu0 0.0
  %54 = vmatpush1.msra.mxu0 %v33
  %55 = vmatprep.subr.mxu0 0.0
  %56 = vmatpush1.msra.mxu0 %v32
  %57 = vmatprep.subr.mxu0 0.0
  %58 = vmatpush1.msra.mxu0 %v31
  %59 = vmatprep.subr.mxu0 0.0
  %60 = vmatpush1.msra.mxu0 %v30
  %61 = vmatprep.subr.mxu0 0.0
  %62 = vmatpush1.msra.mxu0 %v29
  %63 = vmatprep.subr.mxu0 0.0
  %64 = vmatpush1.msra.mxu0 %v28
  %65 = vmatprep.subr.mxu0 0.0
  %66 = vmatpush1.msra.mxu0 %v27
  %67 = vmatprep.subr.mxu0 0.0
  %68 = vmatpush1.msra.mxu0 %v26
  %69 = vmatprep.subr.mxu0 0.0
  %70 = vmatpush1.msra.mxu0 %v25
  %71 = vmatprep.subr.mxu0 0.0
  %72 = vmatpush1.msra.mxu0 %v24
  %73 = vmatprep.subr.mxu0 0.0
  %74 = vmatpush1.msra.mxu0 %v23
  %75 = vmatprep.subr.mxu0 0.0
  %76 = vmatpush1.msra.mxu0 %v22
  %77 = vmatprep.subr.mxu0 0.0
  %78 = vmatpush2.msra.mxu0 0.0
  %79 = vmatprep.subr.mxu0 0.0
  %80 = vmatpush2.msra.mxu0 0.0
  %81 = vmatprep.subr.mxu0 0.0
  %82 = vmatpush2.msra.mxu0 0.0
  %83 = vmatprep.subr.mxu0 0.0
  %84 = vmatpush2.msra.mxu0 0.0
  %85 = vmatprep.subr.mxu0 0.0
  %86 = vmatpush2.msra.mxu0 0.0
  %87 = vmatprep.subr.mxu0 0.0
  %88 = vmatpush2.msra.mxu0 0.0
  %89 = vmatprep.subr.mxu0 0.0
  %90 = vmatpush2.msra.mxu0 0.0
  %91 = vmatprep.subr.mxu0 0.0
  %92 = vmatpush2.msra.mxu0 0.0
  %93 = vmatprep.subr.mxu0 0.0
  %94 = vmatpush2.msra.mxu0 0.0
  %95 = vmatprep.subr.mxu0 0.0
  %96 = vmatpush2.msra.mxu0 0.0
  %97 = vmatprep.subr.mxu0 0.0
  %98 = vmatpush2.msra.mxu0 0.0
  %99 = vmatprep.subr.mxu0 0.0
  %100 = vmatpush2.msra.mxu0 0.0
  %101 = vmatprep.subr.mxu0 0.0
  %102 = vmatpush2.msra.mxu0 0.0
  %103 = vmatprep.subr.mxu0 0.0
  %104 = vmatpush2.msra.mxu0 0.0
  %105 = vmatprep.subr.mxu0 0.0
  %106 = vmatpush2.msra.mxu0 0.0
  %107 = vmatprep.subr.mxu0 0.0
  %108 = vmatpush2.msra.mxu0 0.0
  %109 = vmatprep.mubr.f32.mxu0 0.0
  %110 = vmatmul.mubr.f32.gmra.mxu0 %v20
  %v111 = vpop.f32.mrf.mxu0
  %v112 = vadd.f32 %v43, %v111
  %v113 = vpop.f32.mrf.mxu0
  %114 = vmatprep.mubr.f32.mxu0 0.0
  %115 = vmatmul.mubr.f32.gmra.mxu0 %v21
  %v116 = vpop.f32.mrf.mxu0
  %v117 = vadd.f32 %v43, %v116
  %v118 = vpop.f32.mrf.mxu0
  %119 = vdwg.mxu0
  %v120 = vmax.f32 %v112, 0.0
  %v121 = vmax.f32 %v117, 0.0
  %v122 = vld [vmem:[%s3] sm:$0xff]
  %v123 = vld [vmem:[%s3 + $0x8] sm:$0xff]
  %v124 = vld [vmem:[%s3 + $0x10] sm:$0xff]
  %v125 = vld [vmem:[%s3 + $0x18] sm:$0xff]
  %v126 = vld [vmem:[%s3 + $0x20] sm:$0xff]
  %v127 = vld [vmem:[%s3 + $0x28] sm:$0xff]
  %v128 = vld [vmem:[%s3 + $0x30] sm:$0xff]
  %v129 = vld [vmem:[%s3 + $0x38] sm:$0xff]
  %v130 = vld [vmem:[%s3 + $0x40] sm:$0xff]
  %v131 = vld [vmem:[%s3 + $0x48] sm:$0xff]
  %v132 = vld [vmem:[%s3 + $0x50] sm:$0xff]
  %v133 = vld [vmem:[%s3 + $0x58] sm:$0xff]
  %v134 = vld [vmem:[%s3 + $0x60] sm:$0xff]
  %v135 = vld [vmem:[%s3 + $0x68] sm:$0xff]
  %v136 = vld [vmem:[%s3 + $0x70] sm:$0xff]
  %v137 = vld [vmem:[%s3 + $0x78] sm:$0xff]
  %v138 = vld [vmem:[%s4] sm:$0x1]
  %v140 = vlaneseq
  %v141 = vshrl.u32 %v140, 7
  %v142 = vsub.s32 0, %v141
  %v143 = vrot.slane %v138, %v142
  %145 = vmatprep.subr.mxu0 0.0
  %146 = vmatpush1.msra.mxu0 %v137
  %147 = vmatprep.subr.mxu0 0.0
  %148 = vmatpush1.msra.mxu0 %v136
  %149 = vmatprep.subr.mxu0 0.0
  %150 = vmatpush1.msra.mxu0 %v135
  %151 = vmatprep.subr.mxu0 0.0
  %152 = vmatpush1.msra.mxu0 %v134
  %153 = vmatprep.subr.mxu0 0.0
  %154 = vmatpush1.msra.mxu0 %v133
  %155 = vmatprep.subr.mxu0 0.0
  %156 = vmatpush1.msra.mxu0 %v132
  %157 = vmatprep.subr.mxu0 0.0
  %158 = vmatpush1.msra.mxu0 %v131
  %159 = vmatprep.subr.mxu0 0.0
  %160 = vmatpush1.msra.mxu0 %v130
  %161 = vmatprep.subr.mxu0 0.0
  %162 = vmatpush1.msra.mxu0 %v129
  %163 = vmatprep.subr.mxu0 0.0
  %164 = vmatpush1.msra.mxu0 %v128
  %165 = vmatprep.subr.mxu0 0.0
  %166 = vmatpush1.msra.mxu0 %v127
  %167 = vmatprep.subr.mxu0 0.0
  %168 = vmatpush1.msra.mxu0 %v126
  %169 = vmatprep.subr.mxu0 0.0
  %170 = vmatpush1.msra.mxu0 %v125
  %171 = vmatprep.subr.mxu0 0.0
  %172 = vmatpush1.msra.mxu0 %v124
  %173 = vmatprep.subr.mxu0 0.0
  %174 = vmatpush1.msra.mxu0 %v123
  %175 = vmatprep.subr.mxu0 0.0
  %176 = vmatpush1.msra.mxu0 %v122
  %177 = vmatprep.subr.mxu0 0.0
  %178 = vmatpush2.msra.mxu0 0.0
  %179 = vmatprep.subr.mxu0 0.0
  %180 = vmatpush2.msra.mxu0 0.0
  %181 = vmatprep.subr.mxu0 0.0
  %182 = vmatpush2.msra.mxu0 0.0
  %183 = vmatprep.subr.mxu0 0.0
  %184 = vmatpush2.msra.mxu0 0.0
  %185 = vmatprep.subr.mxu0 0.0
  %186 = vmatpush2.msra.mxu0 0.0
  %187 = vmatprep.subr.mxu0 0.0
  %188 = vmatpush2.msra.mxu0 0.0
  %189 = vmatprep.subr.mxu0 0.0
  %190 = vmatpush2.msra.mxu0 0.0
  %191 = vmatprep.subr.mxu0 0.0
  %192 = vmatpush2.msra.mxu0 0.0
  %193 = vmatprep.subr.mxu0 0.0
  %194 = vmatpush2.msra.mxu0 0.0
  %195 = vmatprep.subr.mxu0 0.0
  %196 = vmatpush2.msra.mxu0 0.0
  %197 = vmatprep.subr.mxu0 0.0
  %198 = vmatpush2.msra.mxu0 0.0
  %199 = vmatprep.subr.mxu0 0.0
  %200 = vmatpush2.msra.mxu0 0.0
  %201 = vmatprep.subr.mxu0 0.0
  %202 = vmatpush2.msra.mxu0 0.0
  %203 = vmatprep.subr.mxu0 0.0
  %204 = vmatpush2.msra.mxu0 0.0
  %205 = vmatprep.subr.mxu0 0.0
  %206 = vmatpush2.msra.mxu0 0.0
  %207 = vmatprep.subr.mxu0 0.0
  %208 = vmatpush2.msra.mxu0 0.0
  %209 = vmatprep.mubr.f32.mxu0 0.0
  %210 = vmatmul.mubr.f32.gmra.mxu0 %v120
  %v211 = vpop.f32.mrf.mxu0
  %v212 = vadd.f32 %v143, %v211
  %v213 = vpop.f32.mrf.mxu0
  %214 = vmatprep.mubr.f32.mxu0 0.0
  %215 = vmatmul.mubr.f32.gmra.mxu0 %v121
  %v216 = vpop.f32.mrf.mxu0
  %v217 = vadd.f32 %v143, %v216
  %v218 = vpop.f32.mrf.mxu0
  %219 = vdwg.mxu0
  %v220 = vadd.f32 %v212, %v20
  %v221 = vadd.f32 %v217, %v21
  %v222 = vlaneseq
  %v223 = vand.u32 %v222, 127
  %vm224 = vcmp.lt.s32.totalorder %v223, 32
  %v225 = vsel %vm224, %v220, 0.0
  %v226 = vsel %vm224, %v221, 0.0
  %227 = vadd.xlane.f32.xlu0 %v225
  %v228 = vpop.xlane.xlu0 %227
  %229 = vadd.xlane.f32.xlu0 %v226
  %v230 = vpop.xlane.xlu0 %229
  %v231 = vmul.f32 %v228, 0.03125
  %v232 = vmul.f32 %v230, 0.03125
  %v233 = vsub.f32 %v225, %v231
  %v234 = vsub.f32 %v226, %v232
  %v235 = vsel %vm224, %v233, 0.0
  %v236 = vsel %vm224, %v234, 0.0
  %v237 = vmul.f32 %v235, %v235
  %v238 = vmul.f32 %v236, %v236
  %239 = vadd.xlane.f32.xlu0 %v237
  %v240 = vpop.xlane.xlu0 %239
  %241 = vadd.xlane.f32.xlu0 %v238
  %v242 = vpop.xlane.xlu0 %241
  %v243 = vmul.f32 %v240, 0.03125
  %v244 = vmul.f32 %v242, 0.03125
  %v245 = vadd.f32 %v243, 1e-05
  %v246 = vadd.f32 %v244, 1e-05
  %v247 = vrsqrt.pop %v245
  %v248 = vrsqrt.pop %v246
  %v249 = vmul.f32 %v235, %v247
  %v250 = vmul.f32 %v236, %v248
  %251 = vst [vmem:[%s5] sm:$0xff] %v249
  %252 = vst [vmem:[%s5 + $0x8] sm:$0xff] %v250
  // Predicated region
  $region22: #{_feed_forward_impl.1} parent=0 // pred_check
    _
  $region23: #{_feed_forward_impl.1} parent=0 // pred_check_branch
    %254 = sbr.rel (0) target = $region25
  $region24: #{_feed_forward_impl.1} parent=0 // pred_region
    _
  $region25: #{_feed_forward_impl.1} parent=0 // pred_fallthru
    _
  // Predicated region
  $region26: #{_feed_forward_impl.1} parent=0 // pred_check
    _
  $region27: #{_feed_forward_impl.1} parent=0 // pred_check_branch
    %256 = sbr.rel (0) target = $region29
  $region28: #{_feed_forward_impl.1} parent=0 // pred_region
    _
  $region29: #{_feed_forward_impl.1} parent=0 // pred_fallthru
    _

// kernel: _feed_forward_impl.1
$region0: #{_feed_forward_impl.1}
  #allocation0 [shape = 'u32[]', space=smem, size = 0x4, offset = 0x4, fixed_abs, tag = 'smem constant byte address 0x4 - core index']
  #allocation1 [shape = 'u32[144,128]{1,0:T(1,128)}', space=vmem, size = 0x12000, scoped, tag = 'internal scratch']
  %s0 = inlined_call_operand.vmem [shape: f32[16,128], index: 0, kind: input, shape index: {}]
  %s1 = inlined_call_operand.vmem [shape: f32[128,128], index: 1, kind: input, shape index: {}]
  %s2 = inlined_call_operand.vmem [shape: f32[1,128], index: 2, kind: input, shape index: {}]
  %s3 = inlined_call_operand.vmem [shape: f32[128,128], index: 3, kind: input, shape index: {}]
  %s4 = inlined_call_operand.vmem [shape: f32[1,128], index: 4, kind: input, shape index: {}]
  %s5 = inlined_call_operand.vmem [shape: f32[16,128], index: 5, kind: output, shape index: {}]
  %s6 = sld [smem:[#allocation0]]
  $region30: #{_feed_forward_impl.1} parent=0
    _
  %s8 = ssub.s32 1, %s6
  %s9 = scalar_select 0, %s8, %s6
  // Predicated region
  $region2: #{_feed_forward_impl.1} parent=0 // pred_check
    _
  $region3: #{_feed_forward_impl.1} parent=0 // pred_check_branch
    %11 = sbr.rel (0) target = $region5
  $region4: #{_feed_forward_impl.1} parent=0 // pred_region
    _
  $region5: #{_feed_forward_impl.1} parent=0 // pred_fallthru
    _
  // Predicated region
  $region6: #{_feed_forward_impl.1} parent=0 // pred_check
    _
  $region7: #{_feed_forward_impl.1} parent=0 // pred_check_branch
    %13 = sbr.rel (0) target = $region9
  $region8: #{_feed_forward_impl.1} parent=0 // pred_region
    _
  $region9: #{_feed_forward_impl.1} parent=0 // pred_fallthru
    _
  // Predicated region
  $region10: #{_feed_forward_impl.1} parent=0 // pred_check
    _
  $region11: #{_feed_forward_impl.1} parent=0 // pred_check_branch
    %15 = sbr.rel (0) target = $region13
  $region12: #{_feed_forward_impl.1} parent=0 // pred_region
    _
  $region13: #{_feed_forward_impl.1} parent=0 // pred_fallthru
    _
  // Predicated region
  $region14: #{_feed_forward_impl.1} parent=0 // pred_check
    _
  $region15: #{_feed_forward_impl.1} parent=0 // pred_check_branch
    %17 = sbr.rel (0) target = $region17
  $region16: #{_feed_forward_impl.1} parent=0 // pred_region
    _
  $region17: #{_feed_forward_impl.1} parent=0 // pred_fallthru
    _
  // Predicated region
  $region18: #{_feed_forward_impl.1} parent=0 // pred_check
    _
  $region19: #{_feed_forward_impl.1} parent=0 // pred_check_branch
    %19 = sbr.rel (0) target = $region21
  $region20: #{_feed_forward_impl.1} parent=0 // pred_region
    _
  $region21: #{_feed_forward_impl.1} parent=0 // pred_fallthru
    _
  %v20 = vld [vmem:[%s0] sm:$0xff]
  %v21 = vld [vmem:[%s0 + $0x8] sm:$0xff]
  %v22 = vld [vmem:[%s1] sm:$0xff]
  %v23 = vld [vmem:[%s1 + $0x8] sm:$0xff]
  %v24 = vld [vmem:[%s1 + $0x10] sm:$0xff]
  %v25 = vld [vmem:[%s1 + $0x18] sm:$0xff]
  %v26 = vld [vmem:[%s1 + $0x20] sm:$0xff]
  %v27 = vld [vmem:[%s1 + $0x28] sm:$0xff]
  %v28 = vld [vmem:[%s1 + $0x30] sm:$0xff]
  %v29 = vld [vmem:[%s1 + $0x38] sm:$0xff]
  %v30 = vld [vmem:[%s1 + $0x40] sm:$0xff]
  %v31 = vld [vmem:[%s1 + $0x48] sm:$0xff]
  %v32 = vld [vmem:[%s1 + $0x50] sm:$0xff]
  %v33 = vld [vmem:[%s1 + $0x58] sm:$0xff]
  %v34 = vld [vmem:[%s1 + $0x60] sm:$0xff]
  %v35 = vld [vmem:[%s1 + $0x68] sm:$0xff]
  %v36 = vld [vmem:[%s1 + $0x70] sm:$0xff]
  %v37 = vld [vmem:[%s1 + $0x78] sm:$0xff]
  %v38 = vld [vmem:[%s2] sm:$0x1]
  %v40 = vlaneseq
  %v41 = vshrl.u32 %v40, 7
  %v42 = vsub.s32 0, %v41
  %v43 = vrot.slane %v38, %v42
  %45 = vmatprep.subr.mxu0 0.0
  %46 = vmatpush1.msra.mxu0 %v37
  %47 = vmatprep.subr.mxu0 0.0
  %48 = vmatpush1.msra.mxu0 %v36
  %49 = vmatprep.subr.mxu0 0.0
  %50 = vmatpush1.msra.mxu0 %v35
  %51 = vmatprep.subr.mxu0 0.0
  %52 = vmatpush1.msra.mxu0 %v34
  %53 = vmatprep.subr.mxu0 0.0
  %54 = vmatpush1.msra.mxu0 %v33
  %55 = vmatprep.subr.mxu0 0.0
  %56 = vmatpush1.msra.mxu0 %v32
  %57 = vmatprep.subr.mxu0 0.0
  %58 = vmatpush1.msra.mxu0 %v31
  %59 = vmatprep.subr.mxu0 0.0
  %60 = vmatpush1.msra.mxu0 %v30
  %61 = vmatprep.subr.mxu0 0.0
  %62 = vmatpush1.msra.mxu0 %v29
  %63 = vmatprep.subr.mxu0 0.0
  %64 = vmatpush1.msra.mxu0 %v28
  %65 = vmatprep.subr.mxu0 0.0
  %66 = vmatpush1.msra.mxu0 %v27
  %67 = vmatprep.subr.mxu0 0.0
  %68 = vmatpush1.msra.mxu0 %v26
  %69 = vmatprep.subr.mxu0 0.0
  %70 = vmatpush1.msra.mxu0 %v25
  %71 = vmatprep.subr.mxu0 0.0
  %72 = vmatpush1.msra.mxu0 %v24
  %73 = vmatprep.subr.mxu0 0.0
  %74 = vmatpush1.msra.mxu0 %v23
  %75 = vmatprep.subr.mxu0 0.0
  %76 = vmatpush1.msra.mxu0 %v22
  %77 = vmatprep.subr.mxu0 0.0
  %78 = vmatpush2.msra.mxu0 0.0
  %79 = vmatprep.subr.mxu0 0.0
  %80 = vmatpush2.msra.mxu0 0.0
  %81 = vmatprep.subr.mxu0 0.0
  %82 = vmatpush2.msra.mxu0 0.0
  %83 = vmatprep.subr.mxu0 0.0
  %84 = vmatpush2.msra.mxu0 0.0
  %85 = vmatprep.subr.mxu0 0.0
  %86 = vmatpush2.msra.mxu0 0.0
  %87 = vmatprep.subr.mxu0 0.0
  %88 = vmatpush2.msra.mxu0 0.0
  %89 = vmatprep.subr.mxu0 0.0
  %90 = vmatpush2.msra.mxu0 0.0
  %91 = vmatprep.subr.mxu0 0.0
  %92 = vmatpush2.msra.mxu0 0.0
  %93 = vmatprep.subr.mxu0 0.0
  %94 = vmatpush2.msra.mxu0 0.0
  %95 = vmatprep.subr.mxu0 0.0
  %96 = vmatpush2.msra.mxu0 0.0
  %97 = vmatprep.subr.mxu0 0.0
  %98 = vmatpush2.msra.mxu0 0.0
  %99 = vmatprep.subr.mxu0 0.0
  %100 = vmatpush2.msra.mxu0 0.0
  %101 = vmatprep.subr.mxu0 0.0
  %102 = vmatpush2.msra.mxu0 0.0
  %103 = vmatprep.subr.mxu0 0.0
  %104 = vmatpush2.msra.mxu0 0.0
  %105 = vmatprep.subr.mxu0 0.0
  %106 = vmatpush2.msra.mxu0 0.0
  %107 = vmatprep.subr.mxu0 0.0
  %108 = vmatpush2.msra.mxu0 0.0
  %109 = vmatprep.mubr.f32.mxu0 0.0
  %110 = vmatmul.mubr.f32.gmra.mxu0 %v20
  %v111 = vpop.f32.mrf.mxu0
  %v112 = vadd.f32 %v43, %v111
  %v113 = vpop.f32.mrf.mxu0
  %114 = vmatprep.mubr.f32.mxu0 0.0
  %115 = vmatmul.mubr.f32.gmra.mxu0 %v21
  %v116 = vpop.f32.mrf.mxu0
  %v117 = vadd.f32 %v43, %v116
  %v118 = vpop.f32.mrf.mxu0
  %119 = vdwg.mxu0
  %v120 = vmax.f32 %v112, 0.0
  %v121 = vmax.f32 %v117, 0.0
  %v122 = vld [vmem:[%s3] sm:$0xff]
  %v123 = vld [vmem:[%s3 + $0x8] sm:$0xff]
  %v124 = vld [vmem:[%s3 + $0x10] sm:$0xff]
  %v125 = vld [vmem:[%s3 + $0x18] sm:$0xff]
  %v126 = vld [vmem:[%s3 + $0x20] sm:$0xff]
  %v127 = vld [vmem:[%s3 + $0x28] sm:$0xff]
  %v128 = vld [vmem:[%s3 + $0x30] sm:$0xff]
  %v129 = vld [vmem:[%s3 + $0x38] sm:$0xff]
  %v130 = vld [vmem:[%s3 + $0x40] sm:$0xff]
  %v131 = vld [vmem:[%s3 + $0x48] sm:$0xff]
  %v132 = vld [vmem:[%s3 + $0x50] sm:$0xff]
  %v133 = vld [vmem:[%s3 + $0x58] sm:$0xff]
  %v134 = vld [vmem:[%s3 + $0x60] sm:$0xff]
  %v135 = vld [vmem:[%s3 + $0x68] sm:$0xff]
  %v136 = vld [vmem:[%s3 + $0x70] sm:$0xff]
  %v137 = vld [vmem:[%s3 + $0x78] sm:$0xff]
  %v138 = vld [vmem:[%s4] sm:$0x1]
  %v140 = vlaneseq
  %v141 = vshrl.u32 %v140, 7
  %v142 = vsub.s32 0, %v141
  %v143 = vrot.slane %v138, %v142
  %145 = vmatprep.subr.mxu0 0.0
  %146 = vmatpush1.msra.mxu0 %v137
  %147 = vmatprep.subr.mxu0 0.0
  %148 = vmatpush1.msra.mxu0 %v136
  %149 = vmatprep.subr.mxu0 0.0
  %150 = vmatpush1.msra.mxu0 %v135
  %151 = vmatprep.subr.mxu0 0.0
  %152 = vmatpush1.msra.mxu0 %v134
  %153 = vmatprep.subr.mxu0 0.0
  %154 = vmatpush1.msra.mxu0 %v133
  %155 = vmatprep.subr.mxu0 0.0
  %156 = vmatpush1.msra.mxu0 %v132
  %157 = vmatprep.subr.mxu0 0.0
  %158 = vmatpush1.msra.mxu0 %v131
  %159 = vmatprep.subr.mxu0 0.0
  %160 = vmatpush1.msra.mxu0 %v130
  %161 = vmatprep.subr.mxu0 0.0
  %162 = vmatpush1.msra.mxu0 %v129
  %163 = vmatprep.subr.mxu0 0.0
  %164 = vmatpush1.msra.mxu0 %v128
  %165 = vmatprep.subr.mxu0 0.0
  %166 = vmatpush1.msra.mxu0 %v127
  %167 = vmatprep.subr.mxu0 0.0
  %168 = vmatpush1.msra.mxu0 %v126
  %169 = vmatprep.subr.mxu0 0.0
  %170 = vmatpush1.msra.mxu0 %v125
  %171 = vmatprep.subr.mxu0 0.0
  %172 = vmatpush1.msra.mxu0 %v124
  %173 = vmatprep.subr.mxu0 0.0
  %174 = vmatpush1.msra.mxu0 %v123
  %175 = vmatprep.subr.mxu0 0.0
  %176 = vmatpush1.msra.mxu0 %v122
  %177 = vmatprep.subr.mxu0 0.0
  %178 = vmatpush2.msra.mxu0 0.0
  %179 = vmatprep.subr.mxu0 0.0
  %180 = vmatpush2.msra.mxu0 0.0
  %181 = vmatprep.subr.mxu0 0.0
  %182 = vmatpush2.msra.mxu0 0.0
  %183 = vmatprep.subr.mxu0 0.0
  %184 = vmatpush2.msra.mxu0 0.0
  %185 = vmatprep.subr.mxu0 0.0
  %186 = vmatpush2.msra.mxu0 0.0
  %187 = vmatprep.subr.mxu0 0.0
  %188 = vmatpush2.msra.mxu0 0.0
  %189 = vmatprep.subr.mxu0 0.0
  %190 = vmatpush2.msra.mxu0 0.0
  %191 = vmatprep.subr.mxu0 0.0
  %192 = vmatpush2.msra.mxu0 0.0
  %193 = vmatprep.subr.mxu0 0.0
  %194 = vmatpush2.msra.mxu0 0.0
  %195 = vmatprep.subr.mxu0 0.0
  %196 = vmatpush2.msra.mxu0 0.0
  %197 = vmatprep.subr.mxu0 0.0
  %198 = vmatpush2.msra.mxu0 0.0
  %199 = vmatprep.subr.mxu0 0.0
  %200 = vmatpush2.msra.mxu0 0.0
  %201 = vmatprep.subr.mxu0 0.0
  %202 = vmatpush2.msra.mxu0 0.0
  %203 = vmatprep.subr.mxu0 0.0
  %204 = vmatpush2.msra.mxu0 0.0
  %205 = vmatprep.subr.mxu0 0.0
  %206 = vmatpush2.msra.mxu0 0.0
  %207 = vmatprep.subr.mxu0 0.0
  %208 = vmatpush2.msra.mxu0 0.0
  %209 = vmatprep.mubr.f32.mxu0 0.0
  %210 = vmatmul.mubr.f32.gmra.mxu0 %v120
  %v211 = vpop.f32.mrf.mxu0
  %v212 = vadd.f32 %v143, %v211
  %v213 = vpop.f32.mrf.mxu0
  %214 = vmatprep.mubr.f32.mxu0 0.0
  %215 = vmatmul.mubr.f32.gmra.mxu0 %v121
  %v216 = vpop.f32.mrf.mxu0
  %v217 = vadd.f32 %v143, %v216
  %v218 = vpop.f32.mrf.mxu0
  %219 = vdwg.mxu0
  %v220 = vadd.f32 %v212, %v20
  %v221 = vadd.f32 %v217, %v21
  %v222 = vlaneseq
  %v223 = vand.u32 %v222, 127
  %vm224 = vcmp.lt.s32.totalorder %v223, 32
  %v225 = vsel %vm224, %v220, 0.0
  %v226 = vsel %vm224, %v221, 0.0
  %227 = vadd.xlane.f32.xlu0 %v225
  %v228 = vpop.xlane.xlu0 %227
  %229 = vadd.xlane.f32.xlu0 %v226
  %v230 = vpop.xlane.xlu0 %229
  %v231 = vmul.f32 %v228, 0.03125
  %v232 = vmul.f32 %v230, 0.03125
  %v233 = vsub.f32 %v225, %v231
  %v234 = vsub.f32 %v226, %v232
  %v235 = vsel %vm224, %v233, 0.0
  %v236 = vsel %vm224, %v234, 0.0
  %v237 = vmul.f32 %v235, %v235
  %v238 = vmul.f32 %v236, %v236
  %239 = vadd.xlane.f32.xlu0 %v237
  %v240 = vpop.xlane.xlu0 %239
  %241 = vadd.xlane.f32.xlu0 %v238
  %v242 = vpop.xlane.xlu0 %241
  %v243 = vmul.f32 %v240, 0.03125
  %v244 = vmul.f32 %v242, 0.03125
  %v245 = vadd.f32 %v243, 1e-05
  %v246 = vadd.f32 %v244, 1e-05
  %v247 = vrsqrt.pop %v245
  %v248 = vrsqrt.pop %v246
  %v249 = vmul.f32 %v235, %v247
  %v250 = vmul.f32 %v236, %v248
  %251 = vst [vmem:[%s5] sm:$0xff] %v249
  %252 = vst [vmem:[%s5 + $0x8] sm:$0xff] %v250
  // Predicated region
  $region22: #{_feed_forward_impl.1} parent=0 // pred_check
    _
  $region23: #{_feed_forward_impl.1} parent=0 // pred_check_branch
    %254 = sbr.rel (0) target = $region25
  $region24: #{_feed_forward_impl.1} parent=0 // pred_region
    _
  $region25: #{_feed_forward_impl.1} parent=0 // pred_fallthru
    _
  // Predicated region
  $region26: #{_feed_forward_impl.1} parent=0 // pred_check
    _
  $region27: #{_feed_forward_impl.1} parent=0 // pred_check_branch
    %256 = sbr.rel (0) target = $region29
  $region28: #{_feed_forward_impl.1} parent=0 // pred_region
    _
  $region29: #{_feed_forward_impl.1} parent=0 // pred_fallthru
    _

</llo_original>
